<compile_context>
chip_gen: v7x
topology: tpu7x:2x2x1
jax: 0.10.0
libtpu: 0.0.40
codegen_flags: <defaults>
</compile_context>

<pallas_src>
import jax
import jax.numpy as jnp
from jax.experimental import pallas as pl
from jax.experimental.pallas import tpu as pltpu


# ----------------------------------------------------------------------------
# Deterministic parameter init (shapes from ExampleModel.__init__).
# nn.Conv2d(3, 3, 3) -> weight (3, 3, 3, 3), bias (3,).  Unused in forward
# (exactly like the PyTorch module); kept OUT of the forward path so they add
# no dead HBM traffic.
# ----------------------------------------------------------------------------
def init_params():
    kw = jax.random.PRNGKey(42)
    k_w, k_b = jax.random.split(kw)
    fan_in = 3 * 3 * 3
    bound = 1.0 / jnp.sqrt(fan_in)
    conv_weight = jax.random.uniform(k_w, (3, 3, 3, 3), jnp.float32, -bound, bound)
    conv_bias = jax.random.uniform(k_b, (3,), jnp.float32, -bound, bound)
    return conv_weight, conv_bias


# ----------------------------------------------------------------------------
# Pallas kernel: identity copy of one lane-dense tile.
# ----------------------------------------------------------------------------
def _copy_kernel(x_ref, o_ref):
    o_ref[...] = x_ref[...]


_LANES = 128
_MAX_BLOCK_ROWS = 2048  # 2048 * 128 * 4B = 1 MiB/block (f32); 2 arrays x 2 bufs = 4 MiB


def example_model_forward(img, img_metas=None, return_loss=False, **kwargs):
    """Pallas equivalent of ExampleModel.forward: returns img unchanged."""
    del img_metas, return_loss, kwargs  # unused, same as the PyTorch module

    total = img.size
    if total % _LANES == 0:
        # Lane-dense path: flatten to (rows, 128) so stores are full-lane.
        rows = total // _LANES
        flat = img.reshape(rows, _LANES)

        if rows <= _MAX_BLOCK_ROWS:
            block_rows = rows            # full-extent block (always a legal tile)
        else:
            block_rows = _MAX_BLOCK_ROWS  # multiple of 8 -> satisfies (8, 128) rule

        grid = (pl.cdiv(rows, block_rows),)

        out_flat = pl.pallas_call(
            _copy_kernel,
            out_shape=jax.ShapeDtypeStruct((rows, _LANES), img.dtype),
            grid=grid,
            in_specs=[pl.BlockSpec((block_rows, _LANES), lambda i: (i, 0))],
            out_specs=pl.BlockSpec((block_rows, _LANES), lambda i: (i, 0)),
            input_output_aliases={0: 0},
            compiler_params=pltpu.CompilerParams(
                dimension_semantics=("parallel",),
            ),
        )(flat)
        return out_flat.reshape(img.shape)

    # Fallback for element counts not divisible by 128: whole array as one
    # block (legal since block dims == array dims).
    # TODO(synk): pad-and-tile for very large non-128-multiple inputs.
    return pl.pallas_call(
        _copy_kernel,
        out_shape=jax.ShapeDtypeStruct(img.shape, img.dtype),
        input_output_aliases={0: 0},
    )(img)


if __name__ == "__main__":
    # Unused params (declared in __init__ of the PyTorch module).
    conv_weight, conv_bias = init_params()

    # Small NCHW image consistent with Conv2d(3, 3, 3): batch=2, C=3, 16x16.
    key = jax.random.PRNGKey(0)
    img = jax.random.normal(key, (2, 3, 16, 16), dtype=jnp.float32)
    img_metas = [{"ori_shape": (16, 16, 3)} for _ in range(2)]

    out = example_model_forward(img, img_metas, return_loss=False)
    out = jax.block_until_ready(out)

    assert out.shape == img.shape and out.dtype == img.dtype
    assert bool(jnp.all(out == img))
    print("KERNEL_OK")
</pallas_src>

<mosaic_0001>
module attributes {stable_mosaic.version = 11 : i64} {
  func.func @_copy_kernel(%arg0: i32, %arg1: memref<12x128xf32, #tpu.memory_space<vmem>>, %arg2: memref<12x128xf32, #tpu.memory_space<vmem>>) attributes {dimension_semantics = [#tpu.dimension_semantics<parallel>], iteration_bounds = array<i64: 1>, scalar_prefetch = 0 : i64, scratch_operands = 0 : i64, tpu.core_type = #tpu.core_type<tc>, window_params = [{transform_indices = @transform_0, window_bounds = array<i64: 12, 128>}, {transform_indices = @transform_1, window_bounds = array<i64: 12, 128>}]} {
    %c0 = arith.constant 0 : index
    %c0_0 = arith.constant 0 : index
    %0 = vector.load %arg1[%c0, %c0_0] : memref<12x128xf32, #tpu.memory_space<vmem>>, vector<12x128xf32>
    %c0_1 = arith.constant 0 : index
    %c0_2 = arith.constant 0 : index
    %1 = vector.load %arg2[%c0_1, %c0_2] : memref<12x128xf32, #tpu.memory_space<vmem>>, vector<12x128xf32>
    tpu.vector_store %arg2[%c0_1, %c0_2], %0 {strides = array<i32>} : memref<12x128xf32, #tpu.memory_space<vmem>>, vector<12x128xf32>,
    return
  }
  func.func @transform_0(%arg0: i32) -> (i32, i32) {
    %c0_i32 = arith.constant 0 : i32
    %c0_i32_0 = arith.constant 0 : i32
    return %arg0, %c0_i32 : i32, i32
  }
  func.func @transform_1(%arg0: i32) -> (i32, i32) {
    %c0_i32 = arith.constant 0 : i32
    %c0_i32_0 = arith.constant 0 : i32
    return %arg0, %c0_i32 : i32, i32
  }
}

</mosaic_0001>

<llo_original>
// kernel: tpu_custom_call.1
$region0: #{tpu_custom_call.1}
  #allocation0 [shape = 'u32[]', space=smem, size = 0x4, offset = 0x4, fixed_abs, tag = 'smem constant byte address 0x4 - core index']
  #allocation1 [shape = 'u32[144,128]{1,0:T(1,128)}', space=vmem, size = 0x12000, scoped, tag = 'internal scratch']
  %s0 = inlined_call_operand.hbm [shape: f32[12,128], index: 0, kind: input, shape index: {}, may-alias: {0,1}]
  %s1 = inlined_call_operand.hbm [shape: f32[12,128], index: 1, kind: output, shape index: {}, may-alias: {0,1}]
  %s2 = sld [smem:[#allocation0]]
  $region18: #{tpu_custom_call.1} parent=0
    _
  %s4 = ssub.s32 1, %s2
  %s5 = scalar_select 0, %s4, %s2
  $region1: #{tpu_custom_call.1} parent=0
    #allocation2 [shape = 'u8[8192]{0}', space=vmem, size = 0x2000, scoped, tag = 'input window, operand 0, single buffered']
    #allocation3 [shape = 's32[1]{0}', space=sflag, size = 0x4, scoped, tag = 'scoped memory for tpu_custom_call.1']
    #allocation4 [shape = 's32[1]{0}', space=sflag, size = 0x4, scoped, tag = 'scoped memory for tpu_custom_call.1']
    #allocation5 [shape = 'u8[8192]{0}', space=vmem, size = 0x2000, scoped, tag = 'output window, operand 0, single buffered']
    %6 = vsyncpa [#allocation3], 0
    %7 = vsyncpa [#allocation4], 0
    // Predicated region
    $region2: #{tpu_custom_call.1} parent=1 // pred_check
      _
    $region3: #{tpu_custom_call.1} parent=1 // pred_check_branch
      %9 = sbr.rel (0) target = $region5
    $region4: #{tpu_custom_call.1} parent=1 // pred_region
      %s11 = ssub.s32 256, 256
      %12 = vsyncadd [#allocation3], %s11
      %s13 = sshll.u32 [#allocation2], 4
      %s14 = int_to_ptr.vmem [resolvable:$true] %s13
      %19 = dma.hbm_to_vmem [thread:$0]  %s0, 256, %s14, [#allocation3], 128, 128, 8
    $region5: #{tpu_custom_call.1} parent=1 // pred_fallthru
      _
    // Predicated region
    $region6: #{tpu_custom_call.1} parent=1 // pred_check
      _
    $region7: #{tpu_custom_call.1} parent=1 // pred_check_branch
      %21 = sbr.rel (0) target = $region9
    $region8: #{tpu_custom_call.1} parent=1 // pred_region
      %22 = dma.done [#allocation3], 256
    $region9: #{tpu_custom_call.1} parent=1 // pred_fallthru
      _
    %v23 = vld [vmem:[#allocation2] sm:$0xff]
    %v24 = vld [vmem:[#allocation2 + $0x8] sm:$0xf]
    %25 = vst [vmem:[#allocation5] sm:$0xff] %v23
    %26 = vst [vmem:[#allocation5 + $0x8] sm:$0xf] %v24
    // Predicated region
    $region10: #{tpu_custom_call.1} parent=1 // pred_check
      _
    $region11: #{tpu_custom_call.1} parent=1 // pred_check_branch
      %28 = sbr.rel (0) target = $region13
    $region12: #{tpu_custom_call.1} parent=1 // pred_region
      %s30 = ssub.s32 256, 256
      %31 = vsyncadd [#allocation4], %s30
      %s32 = sshll.u32 [#allocation5], 4
      %s33 = int_to_ptr.vmem [resolvable:$true] %s32
      %38 = dma.vmem_to_hbm [thread:$0]  %s33, 256, %s1, [#allocation4], 128, 128, 8
    $region13: #{tpu_custom_call.1} parent=1 // pred_fallthru
      _
    // Predicated region
    $region14: #{tpu_custom_call.1} parent=1 // pred_check
      _
    $region15: #{tpu_custom_call.1} parent=1 // pred_check_branch
      %40 = sbr.rel (0) target = $region17
    $region16: #{tpu_custom_call.1} parent=1 // pred_region
      %41 = dma.done [#allocation4], 256
    $region17: #{tpu_custom_call.1} parent=1 // pred_fallthru
      _
    %42 = vsyncpa [#allocation3], 1
    %43 = vsyncpa [#allocation4], 1

</llo_original>
